<compile_context>
chip_gen: v5e
topology: v5e:2x2
jax: 0.10.0
libtpu: 0.0.40
codegen_flags: <defaults>
</compile_context>

<pallas_src>
import functools
import numpy as np
import jax
import jax.numpy as jnp
from jax import lax
from jax.experimental import pallas as pl
from jax.experimental.pallas import tpu as pltpu

SELU_ALPHA = 1.6732632423543772
SELU_SCALE = 1.0507009873554804
BN_EPS = 1e-5


def _selu(x):
    return SELU_SCALE * jnp.where(x > 0, x, SELU_ALPHA * (jnp.exp(x) - 1.0))


def _round_up(a, b):
    return -(-a // b) * b


# ----------------------------- Pallas kernel ------------------------------ #
def _tfb_kernel(*refs, cfg):
    """One grid step: a TILE_R-row tile of x -> (TILE_R, 4*C*w_out) output slab."""
    n_x = cfg["n_x"]
    x_refs = refs[:n_x]               # de-interleaved x tiles, (s, TILE_R, Wq/s)
    p_ref = refs[n_x]                 # folded weights + shifts, (P_rows, C*w_out)
    out_ref = refs[n_x + 1]           # (TILE_R, 4*C*w_out)
    C, w_out = cfg["C"], cfg["w_out"]

    def widen(v):                     # (TILE_R, w_out) -> (TILE_R, C*w_out)
        return jnp.concatenate([v] * C, axis=1)

    slabs = []
    for b, br in enumerate(cfg["branches"]):
        xr = x_refs[br["x_idx"]]
        if br["kind"] == "conv":
            acc = None
            for t, (r0, q0) in enumerate(br["taps"]):
                tap = xr[r0, :, q0:q0 + w_out]                        # (TILE_R, w_out)
                w_row = p_ref[br["wrow"] + t:br["wrow"] + t + 1, :]   # (1, C*w_out)
                term = widen(tap) * w_row
                acc = term if acc is None else acc + term
        else:  # max-pool -> 1x1 conv (folded with BN scale)
            m = None
            for t, (r0, q0) in enumerate(br["taps"]):
                tap = xr[r0, :, q0:q0 + w_out]
                mask = br["masks"][t]
                if mask is not None:                                  # -inf pool padding
                    tap = jnp.where(mask, tap, -jnp.inf)
                m = tap if m is None else jnp.maximum(m, tap)
            acc = widen(m) * p_ref[br["wrow"]:br["wrow"] + 1, :]
        shift = p_ref[cfg["shift_row"] + b:cfg["shift_row"] + b + 1, :]
        slabs.append(acc + shift)

    y = jnp.concatenate(slabs, axis=1)          # (TILE_R, 4*C*w_out), lane-dense
    out_ref[...] = _selu(y)                     # single wide store


# ------------------------------- wrapper ----------------------------------- #
def _pads(kerSize_1, kerSize_2, kerSize_3, pool_ker):
    pad1 = (round(kerSize_1 / 2) - 1) if kerSize_1 % 2 == 0 else (round(kerSize_1 / 2) - 2)
    pad2 = round(kerSize_2 / 2) - 1
    pad3 = round(kerSize_3 / 2) - 1
    pad4 = round(pool_ker / 2) - 1
    return pad1, pad2, pad3, pad4


def tfb_forward(x, params, *, kerSize_1, kerSize_2, kerSize_3, kerStr,
                out_chan, pool_ker, pool_str, tile_r=None):
    N, Cin, H, W = x.shape
    assert Cin == 1
    C = out_chan
    pad1, pad2, pad3, pad4 = _pads(kerSize_1, kerSize_2, kerSize_3, pool_ker)
    for p in (pad1, pad2, pad3, pad4):
        assert p >= 0, "negative padding unsupported (would also fail in PyTorch)"

    w_out = (W + 2 * pad1 - kerSize_1) // kerStr + 1
    assert w_out == (W + 2 * pad2 - kerSize_2) // kerStr + 1
    assert w_out == (W + 2 * pad3 - kerSize_3) // kerStr + 1
    assert w_out == (W + 2 * pad4 - pool_ker) // pool_str + 1

    # --- row tiling (sublane axis) ---
    R = N * H
    if tile_r is None:
        tile_r = min(512, _round_up(R, 8))      # biggest tile that stays tiny in VMEM
    tile_r = _round_up(min(tile_r, _round_up(R, 8)), 8)
    R_pad = _round_up(R, tile_r)
    grid = (R_pad // tile_r,)

    pad_max = max(pad1, pad2, pad3, pad4)
    Wp = W + 2 * pad_max
    x2d = x.reshape(R, W).astype(jnp.float32)
    xp = jnp.pad(x2d, ((0, R_pad - R), (pad_max, pad_max)))   # zero pad once

    # De-interleave by stride so every tap is a contiguous static lane slice.
    def deinterleave(s):
        Wq = _round_up(Wp, s)
        xq = jnp.pad(xp, ((0, 0), (0, Wq - Wp)))
        return xq.reshape(R_pad, Wq // s, s).transpose(2, 0, 1)   # (s, R_pad, Wq//s)

    branch_defs = [("conv", kerSize_1, kerStr, pad1),
                   ("conv", kerSize_2, kerStr, pad2),
                   ("conv", kerSize_3, kerStr, pad3),
                   ("pool", pool_ker, pool_str, pad4)]

    x_inputs, stride_to_idx, branches = [], {}, []
    wrow = 0
    for kind, k, s, pad in branch_defs:
        if s not in stride_to_idx:                 # share x across equal strides
            stride_to_idx[s] = len(x_inputs)
            x_inputs.append(deinterleave(s))
        taps, masks = [], []
        for t in range(k):
            q0, r0 = divmod(pad_max - pad + t, s)
            taps.append((r0, q0))
            if kind == "pool":
                pos = np.arange(w_out) * s - pad + t
                valid = (pos >= 0) & (pos < W)
                masks.append(None if bool(valid.all()) else valid.reshape(1, w_out))
            else:
                masks.append(None)
        branches.append(dict(kind=kind, x_idx=stride_to_idx[s],
                             wrow=wrow, taps=taps, masks=masks))
        wrow += k if kind == "conv" else 1

    # Fold conv bias + BatchNorm (inference) into weights / shifts.
    scale = params["gamma"] * lax.rsqrt(params["var"] + BN_EPS)          # (4, C)
    shift = params["beta"] + (params["bias"] - params["mean"]) * scale   # (4, C)
    weights = [params["w1"] * scale[0], params["w2"] * scale[1],
               params["w3"] * scale[2], params["w4"] * scale[3]]
    p_rows = [jnp.repeat(w, w_out, axis=1) for w in weights]             # (k_b, C*w_out)
    p_rows.append(jnp.repeat(shift, w_out, axis=1))                      # (4,   C*w_out)
    p_all = jnp.concatenate(p_rows, axis=0).astype(jnp.float32)
    shift_row = wrow

    cfg = dict(n_x=len(x_inputs), C=C, w_out=w_out,
               branches=branches, shift_row=shift_row)

    out_w = 4 * C * w_out
    in_specs = [pl.BlockSpec((xi.shape[0], tile_r, xi.shape[2]),
                             lambda i: (0, i, 0)) for xi in x_inputs]
    in_specs.append(pl.BlockSpec(p_all.shape, lambda i: (0, 0)))   # weights stay resident

    out2d = pl.pallas_call(
        functools.partial(_tfb_kernel, cfg=cfg),
        out_shape=jax.ShapeDtypeStruct((R_pad, out_w), jnp.float32),
        grid=grid,
        in_specs=in_specs,
        out_specs=pl.BlockSpec((tile_r, out_w), lambda i: (i, 0)),
        compiler_params=pltpu.CompilerParams(
            dimension_semantics=("parallel",)),
    )(*x_inputs, p_all)

    # (R, 4C*w_out) -> (N, H, 4C, w_out) -> NCHW (N, 4C, H, w_out)
    return out2d[:R].reshape(N, H, 4 * C, w_out).transpose(0, 2, 1, 3)


# ----------------------- pure-JAX reference (NCHW) ------------------------- #
def tfb_reference(x, params, *, kerSize_1, kerSize_2, kerSize_3, kerStr,
                  out_chan, pool_ker, pool_str):
    C = out_chan
    pad1, pad2, pad3, pad4 = _pads(kerSize_1, kerSize_2, kerSize_3, pool_ker)
    dn = ("NCHW", "OIHW", "NCHW")

    def bn_selu_nchw(y, i):
        sh = (1, C, 1, 1)
        yn = ((y + params["bias"][i].reshape(sh) - params["mean"][i].reshape(sh))
              * (params["gamma"][i].reshape(sh)
                 * lax.rsqrt(params["var"][i].reshape(sh) + BN_EPS))
              + params["beta"][i].reshape(sh))
        return _selu(yn)

    def conv_path(w, k, pad, i):
        w4d = jnp.transpose(w, (1, 0)).reshape(C, 1, 1, k)
        y = lax.conv_general_dilated(x, w4d, window_strides=(1, kerStr),
                                     padding=((0, 0), (pad, pad)),
                                     dimension_numbers=dn)
        return bn_selu_nchw(y, i)

    o1 = conv_path(params["w1"], kerSize_1, pad1, 0)
    o2 = conv_path(params["w2"], kerSize_2, pad2, 1)
    o3 = conv_path(params["w3"], kerSize_3, pad3, 2)

    xp = lax.reduce_window(x, -jnp.inf, lax.max,
                           (1, 1, 1, pool_ker), (1, 1, 1, pool_str),
                           ((0, 0), (0, 0), (0, 0), (pad4, pad4)))
    w4d = jnp.transpose(params["w4"], (1, 0)).reshape(C, 1, 1, 1)
    y4 = lax.conv_general_dilated(xp, w4d, window_strides=(1, 1),
                                  padding=((0, 0), (0, 0)),
                                  dimension_numbers=dn)
    o4 = bn_selu_nchw(y4, 3)
    return jnp.concatenate([o1, o2, o3, o4], axis=1)


# ---------------------------------- main ----------------------------------- #
if __name__ == "__main__":
    cfg = dict(kerSize_1=2, kerSize_2=4, kerSize_3=8, kerStr=2, out_chan=4,
               pool_ker=2, pool_str=2)
    C = cfg["out_chan"]
    N, H, W = 2, 16, 16   # R = N*H = 32 rows; tile_r=8 -> 4-step parallel grid

    key = jax.random.PRNGKey(0)
    ks = jax.random.split(key, 10)
    params = {
        "w1": 0.5 * jax.random.normal(ks[0], (cfg["kerSize_1"], C), jnp.float32),
        "w2": 0.5 * jax.random.normal(ks[1], (cfg["kerSize_2"], C), jnp.float32),
        "w3": 0.5 * jax.random.normal(ks[2], (cfg["kerSize_3"], C), jnp.float32),
        "w4": 0.5 * jax.random.normal(ks[3], (1, C), jnp.float32),
        "bias": 0.1 * jax.random.normal(ks[4], (4, C), jnp.float32),
        "gamma": 1.0 + 0.1 * jax.random.normal(ks[5], (4, C), jnp.float32),
        "beta": 0.1 * jax.random.normal(ks[6], (4, C), jnp.float32),
        "mean": 0.1 * jax.random.normal(ks[7], (4, C), jnp.float32),
        "var": 0.5 + jax.random.uniform(ks[8], (4, C), dtype=jnp.float32),
    }
    x = jax.random.normal(ks[9], (N, 1, H, W), jnp.float32)

    out = jax.block_until_ready(tfb_forward(x, params, **cfg, tile_r=8))
    ref = tfb_reference(x, params, **cfg)

    assert out.shape == (N, 4 * C, H, 8), out.shape
    np.testing.assert_allclose(np.asarray(out), np.asarray(ref),
                               rtol=1e-4, atol=1e-4)
    print("KERNEL_OK")
</pallas_src>

<mosaic_0001>
module attributes {stable_mosaic.version = 11 : i64} {
  func.func @_tfb_kernel(%arg0: i32, %arg1: memref<2x8x11xf32, #tpu.memory_space<vmem>>, %arg2: memref<19x32xf32, #tpu.memory_space<vmem>>, %arg3: memref<8x128xf32, #tpu.memory_space<vmem>>) attributes {dimension_semantics = [#tpu.dimension_semantics<parallel>], iteration_bounds = array<i64: 4>, scalar_prefetch = 0 : i64, scratch_operands = 0 : i64, tpu.core_type = #tpu.core_type<tc>, window_params = [{transform_indices = @transform_0, window_bounds = array<i64: 2, 8, 11>}, {pipeline_mode = #tpu.pipeline_mode<synchronous>, transform_indices = @transform_1, window_bounds = array<i64: 19, 32>}, {transform_indices = @transform_2, window_bounds = array<i64: 8, 128>}]} {
    %c1 = arith.constant 1 : index
    %c0 = arith.constant 0 : index
    %c1_0 = arith.constant 1 : index
    %0 = vector.load %arg1[%c1, %c0, %c1_0] : memref<2x8x11xf32, #tpu.memory_space<vmem>>, vector<1x8x8xf32>
    %1 = vector.shape_cast %0 : vector<1x8x8xf32> to vector<8x8xf32>
    %c0_1 = arith.constant 0 : index
    %c0_2 = arith.constant 0 : index
    %2 = vector.load %arg2[%c0_1, %c0_2] : memref<19x32xf32, #tpu.memory_space<vmem>>, vector<1x32xf32>
    %3 = tpu.concatenate %1, %1, %1, %1 in 1 : vector<8x8xf32>, vector<8x8xf32>, vector<8x8xf32>, vector<8x8xf32> -> vector<8x32xf32>
    %4 = vector.broadcast %2 : vector<1x32xf32> to vector<8x32xf32>
    %5 = arith.mulf %3, %4 : vector<8x32xf32>
    %c0_3 = arith.constant 0 : index
    %c0_4 = arith.constant 0 : index
    %c2 = arith.constant 2 : index
    %6 = vector.load %arg1[%c0_3, %c0_4, %c2] : memref<2x8x11xf32, #tpu.memory_space<vmem>>, vector<1x8x8xf32>
    %7 = vector.shape_cast %6 : vector<1x8x8xf32> to vector<8x8xf32>
    %c1_5 = arith.constant 1 : index
    %c0_6 = arith.constant 0 : index
    %8 = vector.load %arg2[%c1_5, %c0_6] : memref<19x32xf32, #tpu.memory_space<vmem>>, vector<1x32xf32>
    %9 = tpu.concatenate %7, %7, %7, %7 in 1 : vector<8x8xf32>, vector<8x8xf32>, vector<8x8xf32>, vector<8x8xf32> -> vector<8x32xf32>
    %10 = vector.broadcast %8 : vector<1x32xf32> to vector<8x32xf32>
    %11 = arith.mulf %9, %10 : vector<8x32xf32>
    %12 = arith.addf %5, %11 : vector<8x32xf32>
    %c15 = arith.constant 15 : index
    %c0_7 = arith.constant 0 : index
    %13 = vector.load %arg2[%c15, %c0_7] : memref<19x32xf32, #tpu.memory_space<vmem>>, vector<1x32xf32>
    %14 = vector.broadcast %13 : vector<1x32xf32> to vector<8x32xf32>
    %15 = arith.addf %12, %14 : vector<8x32xf32>
    %c0_8 = arith.constant 0 : index
    %c0_9 = arith.constant 0 : index
    %c1_10 = arith.constant 1 : index
    %16 = vector.load %arg1[%c0_8, %c0_9, %c1_10] : memref<2x8x11xf32, #tpu.memory_space<vmem>>, vector<1x8x8xf32>
    %17 = vector.shape_cast %16 : vector<1x8x8xf32> to vector<8x8xf32>
    %c2_11 = arith.constant 2 : index
    %c0_12 = arith.constant 0 : index
    %18 = vector.load %arg2[%c2_11, %c0_12] : memref<19x32xf32, #tpu.memory_space<vmem>>, vector<1x32xf32>
    %19 = tpu.concatenate %17, %17, %17, %17 in 1 : vector<8x8xf32>, vector<8x8xf32>, vector<8x8xf32>, vector<8x8xf32> -> vector<8x32xf32>
    %20 = vector.broadcast %18 : vector<1x32xf32> to vector<8x32xf32>
    %21 = arith.mulf %19, %20 : vector<8x32xf32>
    %c1_13 = arith.constant 1 : index
    %c0_14 = arith.constant 0 : index
    %c1_15 = arith.constant 1 : index
    %22 = vector.load %arg1[%c1_13, %c0_14, %c1_15] : memref<2x8x11xf32, #tpu.memory_space<vmem>>, vector<1x8x8xf32>
    %23 = vector.shape_cast %22 : vector<1x8x8xf32> to vector<8x8xf32>
    %c3 = arith.constant 3 : index
    %c0_16 = arith.constant 0 : index
    %24 = vector.load %arg2[%c3, %c0_16] : memref<19x32xf32, #tpu.memory_space<vmem>>, vector<1x32xf32>
    %25 = tpu.concatenate %23, %23, %23, %23 in 1 : vector<8x8xf32>, vector<8x8xf32>, vector<8x8xf32>, vector<8x8xf32> -> vector<8x32xf32>
    %26 = vector.broadcast %24 : vector<1x32xf32> to vector<8x32xf32>
    %27 = arith.mulf %25, %26 : vector<8x32xf32>
    %28 = arith.addf %21, %27 : vector<8x32xf32>
    %c0_17 = arith.constant 0 : index
    %c0_18 = arith.constant 0 : index
    %c2_19 = arith.constant 2 : index
    %29 = vector.load %arg1[%c0_17, %c0_18, %c2_19] : memref<2x8x11xf32, #tpu.memory_space<vmem>>, vector<1x8x8xf32>
    %30 = vector.shape_cast %29 : vector<1x8x8xf32> to vector<8x8xf32>
    %c4 = arith.constant 4 : index
    %c0_20 = arith.constant 0 : index
    %31 = vector.load %arg2[%c4, %c0_20] : memref<19x32xf32, #tpu.memory_space<vmem>>, vector<1x32xf32>
    %32 = tpu.concatenate %30, %30, %30, %30 in 1 : vector<8x8xf32>, vector<8x8xf32>, vector<8x8xf32>, vector<8x8xf32> -> vector<8x32xf32>
    %33 = vector.broadcast %31 : vector<1x32xf32> to vector<8x32xf32>
    %34 = arith.mulf %32, %33 : vector<8x32xf32>
    %35 = arith.addf %28, %34 : vector<8x32xf32>
    %c1_21 = arith.constant 1 : index
    %c0_22 = arith.constant 0 : index
    %c2_23 = arith.constant 2 : index
    %36 = vector.load %arg1[%c1_21, %c0_22, %c2_23] : memref<2x8x11xf32, #tpu.memory_space<vmem>>, vector<1x8x8xf32>
    %37 = vector.shape_cast %36 : vector<1x8x8xf32> to vector<8x8xf32>
    %c5 = arith.constant 5 : index
    %c0_24 = arith.constant 0 : index
    %38 = vector.load %arg2[%c5, %c0_24] : memref<19x32xf32, #tpu.memory_space<vmem>>, vector<1x32xf32>
    %39 = tpu.concatenate %37, %37, %37, %37 in 1 : vector<8x8xf32>, vector<8x8xf32>, vector<8x8xf32>, vector<8x8xf32> -> vector<8x32xf32>
    %40 = vector.broadcast %38 : vector<1x32xf32> to vector<8x32xf32>
    %41 = arith.mulf %39, %40 : vector<8x32xf32>
    %42 = arith.addf %35, %41 : vector<8x32xf32>
    %c16 = arith.constant 16 : index
    %c0_25 = arith.constant 0 : index
    %43 = vector.load %arg2[%c16, %c0_25] : memref<19x32xf32, #tpu.memory_space<vmem>>, vector<1x32xf32>
    %44 = vector.broadcast %43 : vector<1x32xf32> to vector<8x32xf32>
    %45 = arith.addf %42, %44 : vector<8x32xf32>
    %c0_26 = arith.constant 0 : index
    %c0_27 = arith.constant 0 : index
    %c0_28 = arith.constant 0 : index
    %46 = vector.load %arg1[%c0_26, %c0_27, %c0_28] : memref<2x8x11xf32, #tpu.memory_space<vmem>>, vector<1x8x8xf32>
    %47 = vector.shape_cast %46 : vector<1x8x8xf32> to vector<8x8xf32>
    %c6 = arith.constant 6 : index
    %c0_29 = arith.constant 0 : index
    %48 = vector.load %arg2[%c6, %c0_29] : memref<19x32xf32, #tpu.memory_space<vmem>>, vector<1x32xf32>
    %49 = tpu.concatenate %47, %47, %47, %47 in 1 : vector<8x8xf32>, vector<8x8xf32>, vector<8x8xf32>, vector<8x8xf32> -> vector<8x32xf32>
    %50 = vector.broadcast %48 : vector<1x32xf32> to vector<8x32xf32>
    %51 = arith.mulf %49, %50 : vector<8x32xf32>
    %c1_30 = arith.constant 1 : index
    %c0_31 = arith.constant 0 : index
    %c0_32 = arith.constant 0 : index
    %52 = vector.load %arg1[%c1_30, %c0_31, %c0_32] : memref<2x8x11xf32, #tpu.memory_space<vmem>>, vector<1x8x8xf32>
    %53 = vector.shape_cast %52 : vector<1x8x8xf32> to vector<8x8xf32>
    %c7 = arith.constant 7 : index
    %c0_33 = arith.constant 0 : index
    %54 = vector.load %arg2[%c7, %c0_33] : memref<19x32xf32, #tpu.memory_space<vmem>>, vector<1x32xf32>
    %55 = tpu.concatenate %53, %53, %53, %53 in 1 : vector<8x8xf32>, vector<8x8xf32>, vector<8x8xf32>, vector<8x8xf32> -> vector<8x32xf32>
    %56 = vector.broadcast %54 : vector<1x32xf32> to vector<8x32xf32>
    %57 = arith.mulf %55, %56 : vector<8x32xf32>
    %58 = arith.addf %51, %57 : vector<8x32xf32>
    %c0_34 = arith.constant 0 : index
    %c0_35 = arith.constant 0 : index
    %c1_36 = arith.constant 1 : index
    %59 = vector.load %arg1[%c0_34, %c0_35, %c1_36] : memref<2x8x11xf32, #tpu.memory_space<vmem>>, vector<1x8x8xf32>
    %60 = vector.shape_cast %59 : vector<1x8x8xf32> to vector<8x8xf32>
    %c8 = arith.constant 8 : index
    %c0_37 = arith.constant 0 : index
    %61 = vector.load %arg2[%c8, %c0_37] : memref<19x32xf32, #tpu.memory_space<vmem>>, vector<1x32xf32>
    %62 = tpu.concatenate %60, %60, %60, %60 in 1 : vector<8x8xf32>, vector<8x8xf32>, vector<8x8xf32>, vector<8x8xf32> -> vector<8x32xf32>
    %63 = vector.broadcast %61 : vector<1x32xf32> to vector<8x32xf32>
    %64 = arith.mulf %62, %63 : vector<8x32xf32>
    %65 = arith.addf %58, %64 : vector<8x32xf32>
    %c1_38 = arith.constant 1 : index
    %c0_39 = arith.constant 0 : index
    %c1_40 = arith.constant 1 : index
    %66 = vector.load %arg1[%c1_38, %c0_39, %c1_40] : memref<2x8x11xf32, #tpu.memory_space<vmem>>, vector<1x8x8xf32>
    %67 = vector.shape_cast %66 : vector<1x8x8xf32> to vector<8x8xf32>
    %c9 = arith.constant 9 : index
    %c0_41 = arith.constant 0 : index
    %68 = vector.load %arg2[%c9, %c0_41] : memref<19x32xf32, #tpu.memory_space<vmem>>, vector<1x32xf32>
    %69 = tpu.concatenate %67, %67, %67, %67 in 1 : vector<8x8xf32>, vector<8x8xf32>, vector<8x8xf32>, vector<8x8xf32> -> vector<8x32xf32>
    %70 = vector.broadcast %68 : vector<1x32xf32> to vector<8x32xf32>
    %71 = arith.mulf %69, %70 : vector<8x32xf32>
    %72 = arith.addf %65, %71 : vector<8x32xf32>
    %c0_42 = arith.constant 0 : index
    %c0_43 = arith.constant 0 : index
    %c2_44 = arith.constant 2 : index
    %73 = vector.load %arg1[%c0_42, %c0_43, %c2_44] : memref<2x8x11xf32, #tpu.memory_space<vmem>>, vector<1x8x8xf32>
    %74 = vector.shape_cast %73 : vector<1x8x8xf32> to vector<8x8xf32>
    %c10 = arith.constant 10 : index
    %c0_45 = arith.constant 0 : index
    %75 = vector.load %arg2[%c10, %c0_45] : memref<19x32xf32, #tpu.memory_space<vmem>>, vector<1x32xf32>
    %76 = tpu.concatenate %74, %74, %74, %74 in 1 : vector<8x8xf32>, vector<8x8xf32>, vector<8x8xf32>, vector<8x8xf32> -> vector<8x32xf32>
    %77 = vector.broadcast %75 : vector<1x32xf32> to vector<8x32xf32>
    %78 = arith.mulf %76, %77 : vector<8x32xf32>
    %79 = arith.addf %72, %78 : vector<8x32xf32>
    %c1_46 = arith.constant 1 : index
    %c0_47 = arith.constant 0 : index
    %c2_48 = arith.constant 2 : index
    %80 = vector.load %arg1[%c1_46, %c0_47, %c2_48] : memref<2x8x11xf32, #tpu.memory_space<vmem>>, vector<1x8x8xf32>
    %81 = vector.shape_cast %80 : vector<1x8x8xf32> to vector<8x8xf32>
    %c11 = arith.constant 11 : index
    %c0_49 = arith.constant 0 : index
    %82 = vector.load %arg2[%c11, %c0_49] : memref<19x32xf32, #tpu.memory_space<vmem>>, vector<1x32xf32>
    %83 = tpu.concatenate %81, %81, %81, %81 in 1 : vector<8x8xf32>, vector<8x8xf32>, vector<8x8xf32>, vector<8x8xf32> -> vector<8x32xf32>
    %84 = vector.broadcast %82 : vector<1x32xf32> to vector<8x32xf32>
    %85 = arith.mulf %83, %84 : vector<8x32xf32>
    %86 = arith.addf %79, %85 : vector<8x32xf32>
    %c0_50 = arith.constant 0 : index
    %c0_51 = arith.constant 0 : index
    %c3_52 = arith.constant 3 : index
    %87 = vector.load %arg1[%c0_50, %c0_51, %c3_52] : memref<2x8x11xf32, #tpu.memory_space<vmem>>, vector<1x8x8xf32>
    %88 = vector.shape_cast %87 : vector<1x8x8xf32> to vector<8x8xf32>
    %c12 = arith.constant 12 : index
    %c0_53 = arith.constant 0 : index
    %89 = vector.load %arg2[%c12, %c0_53] : memref<19x32xf32, #tpu.memory_space<vmem>>, vector<1x32xf32>
    %90 = tpu.concatenate %88, %88, %88, %88 in 1 : vector<8x8xf32>, vector<8x8xf32>, vector<8x8xf32>, vector<8x8xf32> -> vector<8x32xf32>
    %91 = vector.broadcast %89 : vector<1x32xf32> to vector<8x32xf32>
    %92 = arith.mulf %90, %91 : vector<8x32xf32>
    %93 = arith.addf %86, %92 : vector<8x32xf32>
    %c1_54 = arith.constant 1 : index
    %c0_55 = arith.constant 0 : index
    %c3_56 = arith.constant 3 : index
    %94 = vector.load %arg1[%c1_54, %c0_55, %c3_56] : memref<2x8x11xf32, #tpu.memory_space<vmem>>, vector<1x8x8xf32>
    %95 = vector.shape_cast %94 : vector<1x8x8xf32> to vector<8x8xf32>
    %c13 = arith.constant 13 : index
    %c0_57 = arith.constant 0 : index
    %96 = vector.load %arg2[%c13, %c0_57] : memref<19x32xf32, #tpu.memory_space<vmem>>, vector<1x32xf32>
    %97 = tpu.concatenate %95, %95, %95, %95 in 1 : vector<8x8xf32>, vector<8x8xf32>, vector<8x8xf32>, vector<8x8xf32> -> vector<8x32xf32>
    %98 = vector.broadcast %96 : vector<1x32xf32> to vector<8x32xf32>
    %99 = arith.mulf %97, %98 : vector<8x32xf32>
    %100 = arith.addf %93, %99 : vector<8x32xf32>
    %c17 = arith.constant 17 : index
    %c0_58 = arith.constant 0 : index
    %101 = vector.load %arg2[%c17, %c0_58] : memref<19x32xf32, #tpu.memory_space<vmem>>, vector<1x32xf32>
    %102 = vector.broadcast %101 : vector<1x32xf32> to vector<8x32xf32>
    %103 = arith.addf %100, %102 : vector<8x32xf32>
    %c1_59 = arith.constant 1 : index
    %c0_60 = arith.constant 0 : index
    %c1_61 = arith.constant 1 : index
    %104 = vector.load %arg1[%c1_59, %c0_60, %c1_61] : memref<2x8x11xf32, #tpu.memory_space<vmem>>, vector<1x8x8xf32>
    %105 = vector.shape_cast %104 : vector<1x8x8xf32> to vector<8x8xf32>
    %c0_62 = arith.constant 0 : index
    %c0_63 = arith.constant 0 : index
    %c2_64 = arith.constant 2 : index
    %106 = vector.load %arg1[%c0_62, %c0_63, %c2_64] : memref<2x8x11xf32, #tpu.memory_space<vmem>>, vector<1x8x8xf32>
    %107 = vector.shape_cast %106 : vector<1x8x8xf32> to vector<8x8xf32>
    %108 = arith.maximumf %105, %107 : vector<8x8xf32>
    %109 = tpu.concatenate %108, %108, %108, %108 in 1 : vector<8x8xf32>, vector<8x8xf32>, vector<8x8xf32>, vector<8x8xf32> -> vector<8x32xf32>
    %c14 = arith.constant 14 : index
    %c0_65 = arith.constant 0 : index
    %110 = vector.load %arg2[%c14, %c0_65] : memref<19x32xf32, #tpu.memory_space<vmem>>, vector<1x32xf32>
    %111 = vector.broadcast %110 : vector<1x32xf32> to vector<8x32xf32>
    %112 = arith.mulf %109, %111 : vector<8x32xf32>
    %c18 = arith.constant 18 : index
    %c0_66 = arith.constant 0 : index
    %113 = vector.load %arg2[%c18, %c0_66] : memref<19x32xf32, #tpu.memory_space<vmem>>, vector<1x32xf32>
    %114 = vector.broadcast %113 : vector<1x32xf32> to vector<8x32xf32>
    %115 = arith.addf %112, %114 : vector<8x32xf32>
    %116 = tpu.concatenate %15, %45, %103, %115 in 1 : vector<8x32xf32>, vector<8x32xf32>, vector<8x32xf32>, vector<8x32xf32> -> vector<8x128xf32>
    %cst = arith.constant 0.000000e+00 : f32
    %117 = vector.broadcast %cst : f32 to vector<8x128xf32>
    %118 = arith.cmpf ogt, %116, %117 : vector<8x128xf32>
    %119 = math.exp %116 : vector<8x128xf32>
    %cst_67 = arith.constant 1.000000e+00 : f32
    %120 = vector.broadcast %cst_67 : f32 to vector<8x128xf32>
    %121 = arith.subf %119, %120 : vector<8x128xf32>
    %cst_68 = arith.constant 1.67326319 : f32
    %122 = vector.broadcast %cst_68 : f32 to vector<8x128xf32>
    %123 = arith.mulf %122, %121 : vector<8x128xf32>
    %124 = arith.select %118, %116, %123 : vector<8x128xi1>, vector<8x128xf32>
    %cst_69 = arith.constant 1.05070102 : f32
    %125 = vector.broadcast %cst_69 : f32 to vector<8x128xf32>
    %126 = arith.mulf %125, %124 : vector<8x128xf32>
    %c0_70 = arith.constant 0 : index
    %c0_71 = arith.constant 0 : index
    %127 = vector.load %arg3[%c0_70, %c0_71] : memref<8x128xf32, #tpu.memory_space<vmem>>, vector<8x128xf32>
    tpu.vector_store %arg3[%c0_70, %c0_71], %126 {strides = array<i32>} : memref<8x128xf32, #tpu.memory_space<vmem>>, vector<8x128xf32>,
    return
  }
  func.func @transform_0(%arg0: i32) -> (i32, i32, i32) {
    %c0_i32 = arith.constant 0 : i32
    %c0_i32_0 = arith.constant 0 : i32
    %c0_i32_1 = arith.constant 0 : i32
    return %c0_i32, %arg0, %c0_i32_0 : i32, i32, i32
  }
  func.func @transform_1(%arg0: i32) -> (i32, i32) {
    %c0_i32 = arith.constant 0 : i32
    %c0_i32_0 = arith.constant 0 : i32
    %c0_i32_1 = arith.constant 0 : i32
    return %c0_i32, %c0_i32_0 : i32, i32
  }
  func.func @transform_2(%arg0: i32) -> (i32, i32) {
    %c0_i32 = arith.constant 0 : i32
    %c0_i32_0 = arith.constant 0 : i32
    return %arg0, %c0_i32 : i32, i32
  }
}

</mosaic_0001>

<llo_original>
// kernel: tpu_custom_call.1
$region0: #{tpu_custom_call.1}
  #allocation0 [shape = 'u32[]', space=smem, size = 0x4, offset = 0x4, fixed_abs, tag = 'smem constant byte address 0x4 - core index']
  #allocation1 [shape = 'u32[72,128]{1,0:T(1,128)}', space=vmem, size = 0x9000, scoped, tag = 'internal scratch']
  %s0 = inlined_call_operand.vmem [shape: f32[2,32,11], index: 0, kind: input, shape index: {}]
  %s1 = inlined_call_operand.vmem [shape: f32[19,32], index: 1, kind: input, shape index: {}]
  %s2 = inlined_call_operand.hbm [shape: f32[32,128], index: 2, kind: output, shape index: {}]
  %s3 = sld [smem:[#allocation0]]
  $region79: #{tpu_custom_call.1} parent=0
    _
  %s5 = ssub.s32 1, %s3
  %s6 = scalar_select 0, %s5, %s3
  $region1: #{tpu_custom_call.1} parent=0
    #allocation2 [shape = 'u8[16384]{0}', space=vmem, size = 0x4000, scoped, tag = 'input window, operand 0']
    #allocation3 [shape = 'u8[8192]{0}', space=vmem, size = 0x2000, scoped, tag = 'output window, operand 0']
    #allocation4 [shape = 's32[2]{0}', space=sflag, size = 0x8, scoped, tag = 'scoped memory for tpu_custom_call.1']
    %7 = vsyncpa [#allocation4], 0
    %s8 = scalar_lea.sflag [#allocation4], 1
    %9 = vsyncpa %s8, 0
    loop: start=0, step=1, limit=6
    $region2: #{tpu_custom_call.1} parent=1 // loop_pre_header
      _
    $region3: #{tpu_custom_call.1} parent=1 // loop_header
      %s11 = sphi 0, %s15
      %p12 = scmp.ge.s32.totalorder %s11, 6
      %s21 = sphi 0, %s23
      %s24 = sphi 0, %s21
      %s25 = sphi 0, %s24
      %s41 = sphi 0, %s25
      %s45 = sphi 0, %s45
      %s47 = sphi 0, %s45
      %s48 = sphi 0, %s47
      %s62 = sphi 0, %s48
      %s68 = sphi 0, %s70
      %s71 = sphi 0, %s68
      %s72 = sphi 0, %s71
      %s88 = sphi 0, %s72
    $region4: #{tpu_custom_call.1} parent=1 // loop_header_branch
      %14 = sbr.rel (%p12) target = $region8
    $region5: #{tpu_custom_call.1} parent=1 // loop_body
      %s16 = ssub.s32 %s11, 1
      %s17 = ssub.s32 %s11, 2
      %s18 = sadd.s32 %s11, 1
      %s19 = ssub.s32 %s11, %s18
      %p20 = scmp.eq.s32.totalorder %s19, 0
      %s22 = sadd.s32 %s21, 1
      %s23 = scalar_select %p20, %s21, %s22
      %p26 = pneg %p20
      %p27 = scmp.eq.s32.totalorder %s11, 3
      %p28 = por %p26, %p27
      %p29 = scmp.ne.s32.totalorder %s21, %s24
      %p30 = scmp.eq.s32.totalorder %s11, 0
      %p31 = por %p29, %p30
      %p32 = scmp.ne.s32.totalorder %s21, %s24
      %p33 = scmp.eq.s32.totalorder %s16, 3
      %p34 = por %p32, %p33
      %p35 = scmp.ne.s32.totalorder %s24, %s25
      %p36 = scmp.eq.s32.totalorder %s16, 0
      %p37 = por %p35, %p36
      %p38 = scmp.ne.s32.totalorder %s24, %s25
      %p39 = scmp.eq.s32.totalorder %s17, 3
      %p40 = por %p38, %p39
      %p42 = scmp.ne.s32.totalorder %s25, %s41
      %p43 = scmp.eq.s32.totalorder %s17, 0
      %p44 = por %p42, %p43
      %s46 = sadd.s32 %s45, 1
      %p49 = scmp.eq.s32.totalorder %s11, 3
      %p50 = scmp.ne.s32.totalorder %s45, %s47
      %p51 = scmp.eq.s32.totalorder %s11, 0
      %p52 = por %p50, %p51
      %p53 = scmp.ne.s32.totalorder %s45, %s47
      %p54 = scmp.eq.s32.totalorder %s16, 3
      %p55 = por %p53, %p54
      %p56 = scmp.ne.s32.totalorder %s47, %s48
      %p57 = scmp.eq.s32.totalorder %s16, 0
      %p58 = por %p56, %p57
      %p59 = scmp.ne.s32.totalorder %s47, %s48
      %p60 = scmp.eq.s32.totalorder %s17, 3
      %p61 = por %p59, %p60
      %p63 = scmp.ne.s32.totalorder %s48, %s62
      %p64 = scmp.eq.s32.totalorder %s17, 0
      %p65 = por %p63, %p64
      %s66 = ssub.s32 %s11, %s18
      %p67 = scmp.eq.s32.totalorder %s66, 0
      %s69 = sadd.s32 %s68, 1
      %s70 = scalar_select %p67, %s68, %s69
      %p73 = pneg %p67
      %p74 = scmp.eq.s32.totalorder %s11, 3
      %p75 = por %p73, %p74
      %p76 = scmp.ne.s32.totalorder %s68, %s71
      %p77 = scmp.eq.s32.totalorder %s11, 0
      %p78 = por %p76, %p77
      %p79 = scmp.ne.s32.totalorder %s68, %s71
      %p80 = scmp.eq.s32.totalorder %s16, 3
      %p81 = por %p79, %p80
      %p82 = scmp.ne.s32.totalorder %s71, %s72
      %p83 = scmp.eq.s32.totalorder %s16, 0
      %p84 = por %p82, %p83
      %p85 = scmp.ne.s32.totalorder %s71, %s72
      %p86 = scmp.eq.s32.totalorder %s17, 3
      %p87 = por %p85, %p86
      %p89 = scmp.ne.s32.totalorder %s72, %s88
      %p90 = scmp.eq.s32.totalorder %s17, 0
      %p91 = por %p89, %p90
      %p92 = scmp.le.s32.totalorder 1, %s11
      %p93 = scmp.lt.s32.totalorder %s11, 5
      %p94 = pnand %p92, %p93
      %p95 = pneg %p94
      // Predicated region
      $region9: #{tpu_custom_call.1} parent=5 // pred_check
        _
      $region10: #{tpu_custom_call.1} parent=5 // pred_check_branch
        %97 = sbr.rel (%p94) target = $region12
      $region11: #{tpu_custom_call.1} parent=5 // pred_region
        %s98 = ssub.s32 %s11, 1
        // Predicated region
        $region13: #{tpu_custom_call.1} parent=11 // pred_check
          %p99 = pneg %p58
        $region14: #{tpu_custom_call.1} parent=11 // pred_check_branch
          %101 = sbr.rel (%p99) target = $region16
        $region15: #{tpu_custom_call.1} parent=11 // pred_region
          _
        $region16: #{tpu_custom_call.1} parent=11 // pred_fallthru
          _
      $region12: #{tpu_custom_call.1} parent=5 // pred_fallthru
        _
      %p102 = scmp.lt.s32.totalorder %s11, 4
      // Predicated region
      $region17: #{tpu_custom_call.1} parent=5 // pred_check
        %p103 = pneg %p102
      $region18: #{tpu_custom_call.1} parent=5 // pred_check_branch
        %105 = sbr.rel (%p103) target = $region20
      $region19: #{tpu_custom_call.1} parent=5 // pred_region
        // Predicated region
        $region21: #{tpu_custom_call.1} parent=19 // pred_check
          %p106 = pneg %p31
        $region22: #{tpu_custom_call.1} parent=19 // pred_check_branch
          %108 = sbr.rel (%p106) target = $region24
        $region23: #{tpu_custom_call.1} parent=19 // pred_region
          %s109 = sand.u32 %s21, 1
          %s110 = sand.u32 %s21, 1
          %s111 = smul.addr %s110, 16
          %s112 = scalar_lea.vmem [#allocation2], %s111
          %s113 = smul.addr %s11, 8
          %s114 = scalar_lea.vmem %s0, %s113
          // Predicated region
          $region25: #{tpu_custom_call.1} parent=23 // pred_check
            _
          $region26: #{tpu_custom_call.1} parent=23 // pred_check_branch
            %116 = sbr.rel (0) target = $region28
          $region27: #{tpu_custom_call.1} parent=23 // pred_region
            // Predicated region
            $region29: #{tpu_custom_call.1} parent=27 // pred_check
              _
            $region30: #{tpu_custom_call.1} parent=27 // pred_check_branch
              %118 = sbr.rel (0) target = $region32
            $region31: #{tpu_custom_call.1} parent=27 // pred_region
              // Predicated region
              $region44: #{tpu_custom_call.1} parent=31 // pred_check
                _
              $region45: #{tpu_custom_call.1} parent=31 // pred_check_branch
                %136 = sbr.rel (0) target = $region47
              $region46: #{tpu_custom_call.1} parent=31 // pred_region
                loop: start=0, step=1, limit=1
                $region48: #{tpu_custom_call.1} parent=46 // loop_pre_header
                  _
                $region49: #{tpu_custom_call.1} parent=46 // loop_header
                  %s138 = sphi 0, %s142
                  %p139 = scmp.ge.s32.totalorder %s138, 1
                  %s143 = sphi %s114, %s114
                  %s144 = sphi %s112, %s112
                $region50: #{tpu_custom_call.1} parent=46 // loop_header_branch
                  %141 = sbr.rel (%p139) target = $region54
                $region51: #{tpu_custom_call.1} parent=46 // loop_body
                  %v145 = vld [vmem:[%s143] sm:$0xff]
                  %146 = vst [vmem:[%s144] sm:$0xff] %v145
                  %v147 = vld [vmem:[%s143 + $0x20] sm:$0xff]
                  %148 = vst [vmem:[%s144 + $0x8] sm:$0xff] %v147
                $region52: #{tpu_custom_call.1} parent=46 // loop_footer
                  %s142 = sadd.s32 1, %s138
                $region53: #{tpu_custom_call.1} parent=46 // loop_footer_branch
                  %137 = sbr.rel target = $region49
                $region54: #{tpu_custom_call.1} parent=46 // loop_exit
                  _
              $region47: #{tpu_custom_call.1} parent=31 // pred_fallthru
                _
              // Predicated region
              $region55: #{tpu_custom_call.1} parent=31 // pred_check
                _
              $region56: #{tpu_custom_call.1} parent=31 // pred_check_branch
                %150 = sbr.rel target = $region58
              $region57: #{tpu_custom_call.1} parent=31 // pred_region
                _
              $region58: #{tpu_custom_call.1} parent=31 // pred_fallthru
                _
            $region32: #{tpu_custom_call.1} parent=27 // pred_fallthru
              _
            // Predicated region
            $region33: #{tpu_custom_call.1} parent=27 // pred_check
              _
            $region34: #{tpu_custom_call.1} parent=27 // pred_check_branch
              %120 = sbr.rel target = $region36
            $region35: #{tpu_custom_call.1} parent=27 // pred_region
              %s122 = ssub.s32 256, 1
              loop: start=0, step=1, limit=1
              $region37: #{tpu_custom_call.1} parent=35 // loop_pre_header
                _
              $region38: #{tpu_custom_call.1} parent=35 // loop_header
                %s124 = sphi 0, %s128
                %p125 = scmp.ge.s32.totalorder %s124, 1
                %s129 = sphi %s114, %s114
                %s130 = sphi %s112, %s112
              $region39: #{tpu_custom_call.1} parent=35 // loop_header_branch
                %127 = sbr.rel (%p125) target = $region43
              $region40: #{tpu_custom_call.1} parent=35 // loop_body
                %v131 = vld [vmem:[%s129] sm:%s122]
                %132 = vst [vmem:[%s130] sm:%s122] %v131
                %v133 = vld [vmem:[%s129 + $0x20] sm:%s122]
                %134 = vst [vmem:[%s130 + $0x8] sm:%s122] %v133
              $region41: #{tpu_custom_call.1} parent=35 // loop_footer
                %s128 = sadd.s32 1, %s124
              $region42: #{tpu_custom_call.1} parent=35 // loop_footer_branch
                %123 = sbr.rel target = $region38
              $region43: #{tpu_custom_call.1} parent=35 // loop_exit
                _
            $region36: #{tpu_custom_call.1} parent=27 // pred_fallthru
              _
          $region28: #{tpu_custom_call.1} parent=23 // pred_fallthru
            _
          %151 = vnop
        $region24: #{tpu_custom_call.1} parent=19 // pred_fallthru
          _
      $region20: #{tpu_custom_call.1} parent=5 // pred_fallthru
        _
      %p152 = scmp.le.s32.totalorder 1, %s11
      %p153 = scmp.lt.s32.totalorder %s11, 5
      %p154 = pnand %p152, %p153
      %p155 = pneg %p154
      // Predicated region
      $region59: #{tpu_custom_call.1} parent=5 // pred_check
        _
      $region60: #{tpu_custom_call.1} parent=5 // pred_check_branch
        %157 = sbr.rel (%p154) target = $region62
      $region61: #{tpu_custom_call.1} parent=5 // pred_region
        %s158 = ssub.s32 %s11, 1
        %s159 = sand.u32 %s24, 1
        %s160 = sand.u32 %s24, 1
        %s161 = smul.addr %s160, 16
        %s162 = scalar_lea.vmem [#allocation2], %s161
        // Predicated region
        $region63: #{tpu_custom_call.1} parent=61 // pred_check
          %p163 = pneg %p37
        $region64: #{tpu_custom_call.1} parent=61 // pred_check_branch
          %165 = sbr.rel (%p163) target = $region66
        $region65: #{tpu_custom_call.1} parent=61 // pred_region
          _
        $region66: #{tpu_custom_call.1} parent=61 // pred_fallthru
          _
        %s166 = sand.u32 %s24, 1
        %s167 = sand.u32 %s24, 1
        %s168 = smul.addr %s167, 16
        %s169 = scalar_lea.vmem [#allocation2], %s168
        %p170 = pneg %p37
        %p171 = pneg %p34
        %p172 = pneg %p58
        %p173 = pneg %p55
        %p174 = pneg %p84
        %p175 = pneg %p81
        %s176 = sand.u32 %s71, 1
        %s177 = scalar_lea.sflag [#allocation4], %s176
        %s178 = sand.u32 %s71, 1
        %s179 = smul.addr %s178, 8
        %s180 = scalar_lea.vmem [#allocation3], %s179
        %s181 = scalar_lea.vmem %s162, 8 [#allocation2]
        %v182 = vld [vmem:[%s181] sm:$0xff]
        %v183 = vld [vmem:[%s1] sm:$0x1]
        %185 = vrot.lane.b32.xlu0 %v182, 127
        %v186 = vpop.permute.xlu0 %185
        %188 = vrot.lane.b32.xlu0 %v182, 7
        %v189 = vpop.permute.xlu0 %188
        %191 = vrot.lane.b32.xlu0 %v182, 15
        %v192 = vpop.permute.xlu0 %191
        %194 = vrot.lane.b32.xlu0 %v182, 23
        %v195 = vpop.permute.xlu0 %194
        %vm197 = vcmask 64512
        %v198 = vsel %vm197, %v186, %v189
        %vm199 = vcmask 130048
        %v200 = vsel %vm199, %v198, %v192
        %vm201 = vcmask 195584
        %v202 = vsel %vm201, %v200, %v195
        %v203 = vperm.slane %v183, 0
        %v204 = vmul.f32 %v202, %v203
        %v205 = vld [vmem:[%s162] sm:$0xff]
        %v206 = vld [vmem:[%s1 + $0x1] sm:$0x1]
        %208 = vrot.lane.b32.xlu0 %v205, 126
        %v209 = vpop.permute.xlu0 %208
        %211 = vrot.lane.b32.xlu0 %v205, 6
        %v212 = vpop.permute.xlu0 %211
        %214 = vrot.lane.b32.xlu0 %v205, 14
        %v215 = vpop.permute.xlu0 %214
        %217 = vrot.lane.b32.xlu0 %v205, 22
        %v218 = vpop.permute.xlu0 %217
        %v220 = vsel %vm197, %v209, %v212
        %v221 = vsel %vm199, %v220, %v215
        %v222 = vsel %vm201, %v221, %v218
        %v223 = vperm.slane %v206, 0
        %v224 = vmul.f32 %v222, %v223
        %v225 = vadd.f32 %v204, %v224
        %v226 = vld [vmem:[%s1 + $0xf] sm:$0x1]
        %v227 = vperm.slane %v226, 0
        %v228 = vadd.f32 %v225, %v227
        %v229 = vld [vmem:[%s1 + $0x2] sm:$0x1]
        %230 = vrot.lane.b32.xlu0 %v205, 127
        %v231 = vpop.permute.xlu0 %230
        %233 = vrot.lane.b32.xlu0 %v205, 7
        %v234 = vpop.permute.xlu0 %233
        %236 = vrot.lane.b32.xlu0 %v205, 15
        %v237 = vpop.permute.xlu0 %236
        %239 = vrot.lane.b32.xlu0 %v205, 23
        %v240 = vpop.permute.xlu0 %239
        %v242 = vsel %vm197, %v231, %v234
        %v243 = vsel %vm199, %v242, %v237
        %v244 = vsel %vm201, %v243, %v240
        %v245 = vperm.slane %v229, 0
        %v246 = vmul.f32 %v244, %v245
        %v247 = vld [vmem:[%s1 + $0x3] sm:$0x1]
        %v248 = vperm.slane %v247, 0
        %v249 = vmul.f32 %v202, %v248
        %v250 = vadd.f32 %v246, %v249
        %v251 = vld [vmem:[%s1 + $0x4] sm:$0x1]
        %v252 = vperm.slane %v251, 0
        %v253 = vmul.f32 %v222, %v252
        %v254 = vadd.f32 %v250, %v253
        %v255 = vld [vmem:[%s1 + $0x5] sm:$0x1]
        %256 = vrot.lane.b32.xlu0 %v182, 126
        %v257 = vpop.permute.xlu0 %256
        %259 = vrot.lane.b32.xlu0 %v182, 6
        %v260 = vpop.permute.xlu0 %259
        %262 = vrot.lane.b32.xlu0 %v182, 14
        %v263 = vpop.permute.xlu0 %262
        %265 = vrot.lane.b32.xlu0 %v182, 22
        %v266 = vpop.permute.xlu0 %265
        %v268 = vsel %vm197, %v257, %v260
        %v269 = vsel %vm199, %v268, %v263
        %v270 = vsel %vm201, %v269, %v266
        %v271 = vperm.slane %v255, 0
        %v272 = vmul.f32 %v270, %v271
        %v273 = vadd.f32 %v254, %v272
        %v274 = vld [vmem:[%s1 + $0x10] sm:$0x1]
        %v275 = vperm.slane %v274, 0
        %v276 = vadd.f32 %v273, %v275
        %v277 = vld [vmem:[%s1 + $0x6] sm:$0x1]
        %278 = vrot.lane.b32.xlu0 %v205, 8
        %v279 = vpop.permute.xlu0 %278
        %281 = vrot.lane.b32.xlu0 %v205, 16
        %v282 = vpop.permute.xlu0 %281
        %284 = vrot.lane.b32.xlu0 %v205, 24
        %v285 = vpop.permute.xlu0 %284
        %v287 = vsel %vm197, %v205, %v279
        %v288 = vsel %vm199, %v287, %v282
        %v289 = vsel %vm201, %v288, %v285
        %v290 = vperm.slane %v277, 0
        %v291 = vmul.f32 %v289, %v290
        %v292 = vld [vmem:[%s1 + $0x7] sm:$0x1]
        %293 = vrot.lane.b32.xlu0 %v182, 8
        %v294 = vpop.permute.xlu0 %293
        %296 = vrot.lane.b32.xlu0 %v182, 16
        %v297 = vpop.permute.xlu0 %296
        %299 = vrot.lane.b32.xlu0 %v182, 24
        %v300 = vpop.permute.xlu0 %299
        %v302 = vsel %vm197, %v182, %v294
        %v303 = vsel %vm199, %v302, %v297
        %v304 = vsel %vm201, %v303, %v300
        %v305 = vperm.slane %v292, 0
        %v306 = vmul.f32 %v304, %v305
        %v307 = vadd.f32 %v291, %v306
        %v308 = vld [vmem:[%s1 + $0x8] sm:$0x1]
        %v309 = vperm.slane %v308, 0
        %v310 = vmul.f32 %v244, %v309
        %v311 = vadd.f32 %v307, %v310
        %v312 = vld [vmem:[%s1 + $0x9] sm:$0x1]
        %v313 = vperm.slane %v312, 0
        %v314 = vmul.f32 %v202, %v313
        %v315 = vadd.f32 %v311, %v314
        %v316 = vld [vmem:[%s1 + $0xa] sm:$0x1]
        %v317 = vperm.slane %v316, 0
        %v318 = vmul.f32 %v222, %v317
        %v319 = vadd.f32 %v315, %v318
        %v320 = vld [vmem:[%s1 + $0xb] sm:$0x1]
        %v321 = vperm.slane %v320, 0
        %v322 = vmul.f32 %v270, %v321
        %v323 = vadd.f32 %v319, %v322
        %v324 = vld [vmem:[%s1 + $0xc] sm:$0x1]
        %325 = vrot.lane.b32.xlu0 %v205, 125
        %v326 = vpop.permute.xlu0 %325
        %328 = vrot.lane.b32.xlu0 %v205, 5
        %v329 = vpop.permute.xlu0 %328
        %331 = vrot.lane.b32.xlu0 %v205, 13
        %v332 = vpop.permute.xlu0 %331
        %334 = vrot.lane.b32.xlu0 %v205, 21
        %v335 = vpop.permute.xlu0 %334
        %v337 = vsel %vm197, %v326, %v329
        %v338 = vsel %vm199, %v337, %v332
        %v339 = vsel %vm201, %v338, %v335
        %v340 = vperm.slane %v324, 0
        %v341 = vmul.f32 %v339, %v340
        %v342 = vadd.f32 %v323, %v341
        %v343 = vld [vmem:[%s1 + $0xd] sm:$0x1]
        %344 = vrot.lane.b32.xlu0 %v182, 125
        %v345 = vpop.permute.xlu0 %344
        %347 = vrot.lane.b32.xlu0 %v182, 5
        %v348 = vpop.permute.xlu0 %347
        %350 = vrot.lane.b32.xlu0 %v182, 13
        %v351 = vpop.permute.xlu0 %350
        %353 = vrot.lane.b32.xlu0 %v182, 21
        %v354 = vpop.permute.xlu0 %353
        %v356 = vsel %vm197, %v345, %v348
        %v357 = vsel %vm199, %v356, %v351
        %v358 = vsel %vm201, %v357, %v354
        %v359 = vperm.slane %v343, 0
        %v360 = vmul.f32 %v358, %v359
        %v361 = vadd.f32 %v342, %v360
        %v362 = vld [vmem:[%s1 + $0x11] sm:$0x1]
        %v363 = vperm.slane %v362, 0
        %v364 = vadd.f32 %v361, %v363
        %v365 = vmax.f32 %v182, %v231
        %367 = vrot.lane.b32.xlu0 %v365, 127
        %v368 = vpop.permute.xlu0 %367
        %370 = vrot.lane.b32.xlu0 %v365, 7
        %v371 = vpop.permute.xlu0 %370
        %373 = vrot.lane.b32.xlu0 %v365, 15
        %v374 = vpop.permute.xlu0 %373
        %376 = vrot.lane.b32.xlu0 %v365, 23
        %v377 = vpop.permute.xlu0 %376
        %v379 = vsel %vm197, %v368, %v371
        %v380 = vsel %vm199, %v379, %v374
        %v381 = vsel %vm201, %v380, %v377
        %v382 = vld [vmem:[%s1 + $0xe] sm:$0x1]
        %v383 = vperm.slane %v382, 0
        %v384 = vmul.f32 %v381, %v383
        %v385 = vld [vmem:[%s1 + $0x12] sm:$0x1]
        %v386 = vperm.slane %v385, 0
        %v387 = vadd.f32 %v384, %v386
        %389 = vrot.lane.b32.xlu0 %v276, 32
        %v390 = vpop.permute.xlu0 %389
        %393 = vrot.lane.b32.xlu0 %v364, 64
        %v394 = vpop.permute.xlu0 %393
        %397 = vrot.lane.b32.xlu0 %v387, 96
        %v398 = vpop.permute.xlu0 %397
        %vm400 = vcmask 261120
        %v401 = vsel %vm400, %v228, %v390
        %vm402 = vcmask 523264
        %v403 = vsel %vm402, %v401, %v394
        %vm404 = vcmask 785408
        %v405 = vsel %vm404, %v403, %v398
        %vm406 = vcmp.gt.f32.partialorder %v405, 0.0
        %v407 = vmul.f32 %v405, 1.442695
        %v408 = vpow.pop %v407
        %v409 = vsub.f32 %v408, 1.0
        %v410 = vmul.f32 %v409, 1.6732632
        %v411 = vsel %vm406, %v405, %v410
        %v412 = vmul.f32 %v411, 1.050701
        %413 = vst [vmem:[%s180] sm:$0xff] %v412
        %s414 = sand.u32 %s71, 1
        %s415 = scalar_lea.sflag [#allocation4], %s414
        %s416 = sand.u32 %s71, 1
        %s417 = smul.addr %s416, 8
        %s418 = scalar_lea.vmem [#allocation3], %s417
        // Predicated region
        $region67: #{tpu_custom_call.1} parent=61 // pred_check
          %p419 = pneg %p81
        $region68: #{tpu_custom_call.1} parent=61 // pred_check_branch
          %421 = sbr.rel (%p419) target = $region70
        $region69: #{tpu_custom_call.1} parent=61 // pred_region
          %423 = vsyncadd %s415, 0
          %s424 = smul.addr %s16, 8
          %s425 = scalar_lea.hbm %s2, %s424
          %s427 = sshll.u32 %s418, 4
          %s428 = int_to_ptr.vmem [resolvable:$true] %s427
          %s429 = sshll.u32 %s425, 4
          %s430 = int_to_ptr.hbm [resolvable:$true] %s429
          %432 = dma.vmem_to_hbm [thread:$0]  %s428, 128, %s430, %s415
        $region70: #{tpu_custom_call.1} parent=61 // pred_fallthru
          _
      $region62: #{tpu_custom_call.1} parent=5 // pred_fallthru
        _
      %p433 = scmp.le.s32.totalorder 2, %s11
      // Predicated region
      $region71: #{tpu_custom_call.1} parent=5 // pred_check
        %p434 = pneg %p433
      $region72: #{tpu_custom_call.1} parent=5 // pred_check_branch
        %436 = sbr.rel (%p434) target = $region74
      $region73: #{tpu_custom_call.1} parent=5 // pred_region
        %s437 = ssub.s32 %s11, 2
        // Predicated region
        $region75: #{tpu_custom_call.1} parent=73 // pred_check
          %p438 = pneg %p87
        $region76: #{tpu_custom_call.1} parent=73 // pred_check_branch
          %440 = sbr.rel (%p438) target = $region78
        $region77: #{tpu_custom_call.1} parent=73 // pred_region
          %s441 = sand.u32 %s72, 1
          %s442 = scalar_lea.sflag [#allocation4], %s441
          %s443 = sand.u32 %s72, 1
          %s444 = smul.addr %s443, 8
          %s445 = scalar_lea.vmem [#allocation3], %s444
          %447 = dma.done %s442, 128
        $region78: #{tpu_custom_call.1} parent=73 // pred_fallthru
          _
      $region74: #{tpu_custom_call.1} parent=5 // pred_fallthru
        _
    $region6: #{tpu_custom_call.1} parent=1 // loop_footer
      %s15 = sadd.s32 1, %s11
    $region7: #{tpu_custom_call.1} parent=1 // loop_footer_branch
      %10 = sbr.rel target = $region3
    $region8: #{tpu_custom_call.1} parent=1 // loop_exit
      _
    %448 = vsyncpa [#allocation4], 1
    %s449 = scalar_lea.sflag [#allocation4], 1
    %450 = vsyncpa %s449, 1

</llo_original>
